<compile_context>
chip_gen: v7x
topology: tpu7x:2x2x1
jax: 0.10.0
libtpu: 0.0.40
codegen_flags: <defaults>
</compile_context>

<pallas_src>
from functools import partial

import numpy as np
import jax
import jax.numpy as jnp
from jax import lax
from jax.experimental import pallas as pl
from jax.experimental.pallas import tpu as pltpu


def _round_up(x, m):
    return (x + m - 1) // m * m


def _make_writer_kernel(N, M, a_off):
    eps = 1e-16

    def kernel(x_ref, wT_ref, b_ref, shift_ref, w0_ref, mem0_ref,
               w_out_ref, mem_ref, w_state):
        t = pl.program_id(0)

        # ---- step 0: pull initial state into the VMEM-resident accumulators --
        @pl.when(t == 0)
        def _init():
            mem_ref[...] = mem0_ref[...]
            w_state[...] = w0_ref[...]

        x = x_ref[0]                     # [B, C]   (this step's controller output)
        mem = mem_ref[...]               # [B, N, M] current memory state
        prev_w = w_state[...]            # [B, N]    previous write weighting

        # ---- fused decoders: one MXU matmul, slice everything out ------------
        dec = jnp.dot(x, wT_ref[...], preferred_element_type=jnp.float32) + b_ref[...]
        k_vec = dec[:, 0:M]                                   # [B, M]
        # merged sigmoid over contiguous [e_lin | g]  -> one exp + one recip
        eg = dec[:, M:2 * M + 1]                              # [B, M+1]
        eg = pl.reciprocal(1.0 + jnp.exp(-eg), approx=False)
        e_t = eg[:, 0:M]                                      # [B, M]
        g = eg[:, M:M + 1]                                    # [B, 1]
        # softplus(beta) (stable form)
        beta_lin = dec[:, 2 * M + 1:2 * M + 2]
        beta = jnp.maximum(beta_lin, 0.0) + jnp.log(1.0 + jnp.exp(-jnp.abs(beta_lin)))
        s_lin = dec[:, 2 * M + 2:2 * M + 5]                   # [B, 3]
        gamma = jnp.maximum(dec[:, 2 * M + 5:2 * M + 6], 0.0) + 1.0
        a_t = dec[:, a_off:a_off + M]                         # [B, M] (8-aligned lanes)

        # softmax over the 3 shift taps
        s_lin = s_lin - jnp.max(s_lin, axis=-1, keepdims=True)
        es = jnp.exp(s_lin)
        s = es * pl.reciprocal(jnp.sum(es, axis=-1, keepdims=True), approx=False)

        # ---- content addressing: cosine similarity on VPU/XLU (no MXU) -------
        dot = jnp.sum(k_vec[:, None, :] * mem, axis=-1)       # [B, N]
        k_sq = jnp.sum(k_vec * k_vec, axis=-1, keepdims=True) # [B, 1]
        m_sq = jnp.sum(mem * mem, axis=-1)                    # [B, N]
        sim = dot * lax.rsqrt(k_sq * m_sq + 1e-30)            # 1 rsqrt instead of 4 ops

        z = beta * sim
        z = z - jnp.max(z, axis=-1, keepdims=True)
        ez = jnp.exp(z)
        w_c = ez * pl.reciprocal(jnp.sum(ez, axis=-1, keepdims=True), approx=False)

        # ---- interpolation gate ----------------------------------------------
        w_g = g * w_c + (1.0 - g) * prev_w                    # [B, N]

        # ---- 3-tap circular convolution: ONE small matmul against [N, 2N] ----
        shifted = jnp.dot(w_g, shift_ref[...], preferred_element_type=jnp.float32)
        w_m1 = shifted[:, 0:N]          # roll(w_g, -1)
        w_p1 = shifted[:, N:2 * N]      # roll(w_g, +1)
        w_tilde = s[:, 0:1] * w_m1 + s[:, 1:2] * w_g + s[:, 2:3] * w_p1

        # ---- sharpening --------------------------------------------------------
        w_pow = jnp.exp(gamma * jnp.log(w_tilde + eps))
        w_t = w_pow * pl.reciprocal(jnp.sum(w_pow, axis=-1, keepdims=True),
                                    approx=False)

        # ---- writing: erase then add ------------------------------------------
        erase = w_t[:, :, None] * e_t[:, None, :]             # [B, N, M]
        add = w_t[:, :, None] * a_t[:, None, :]               # [B, N, M]
        mem_ref[...] = mem * (1.0 - erase) + add              # stays in VMEM

        w_state[...] = w_t
        w_out_ref[0] = w_t

    return kernel


# mem (arg 6) is donated so the input->output alias is real (no defensive copy).
@partial(jax.jit, donate_argnums=(6,))
def writer_forward(controller_outs, waT, ba, wwT, bw, prev_w, mem):
    """Runs the Writer head for T steps.  T=1 == the PyTorch module's forward."""
    T, B, C = controller_outs.shape
    _, N, M = mem.shape

    # ---- fused, reordered, lane-aligned decoder weight [C, ncols] -------------
    # columns: [k(0..M-1) | e_lin(M..2M-1) | g(2M) | beta | s(3) | gamma | pad | a_t]
    a_off = _round_up(2 * M + 6, 8)            # a_t starts at an 8-aligned lane
    ncols = _round_up(a_off + M, 8)            # padded fused output width
    Wf = jnp.zeros((C, ncols), jnp.float32)
    Wf = Wf.at[:, 0:M].set(waT[:, 0:M])                    # k
    Wf = Wf.at[:, M:2 * M].set(wwT[:, 0:M])                # e_lin
    Wf = Wf.at[:, 2 * M].set(waT[:, M + 1])                # g
    Wf = Wf.at[:, 2 * M + 1].set(waT[:, M])                # beta
    Wf = Wf.at[:, 2 * M + 2:2 * M + 5].set(waT[:, M + 2:M + 5])  # s
    Wf = Wf.at[:, 2 * M + 5].set(waT[:, M + 5])            # gamma
    Wf = Wf.at[:, a_off:a_off + M].set(wwT[:, M:2 * M])    # a_t
    bf = jnp.zeros((ncols,), jnp.float32)
    bf = bf.at[0:M].set(ba[0:M])
    bf = bf.at[M:2 * M].set(bw[0:M])
    bf = bf.at[2 * M].set(ba[M + 1])
    bf = bf.at[2 * M + 1].set(ba[M])
    bf = bf.at[2 * M + 2:2 * M + 5].set(ba[M + 2:M + 5])
    bf = bf.at[2 * M + 5].set(ba[M + 5])
    bf = bf.at[a_off:a_off + M].set(bw[M:2 * M])
    bf = bf.reshape(1, ncols)

    # combined circular-shift matrix [pm1 | pp1], built once at trace time.
    eye = np.eye(N, dtype=np.float32)
    shift_mat = jnp.asarray(
        np.concatenate([np.roll(eye, -1, axis=1), np.roll(eye, 1, axis=1)], axis=1))

    kernel = _make_writer_kernel(N, M, a_off)

    flops = T * (2 * B * C * ncols + 2 * B * N * M + 2 * B * N * (2 * N)
                 + 8 * B * N * M)
    transcendentals = T * B * (2 * (M + 1) + 6 + 3 * N + 2 * N)
    bytes_accessed = 4 * (T * B * C + C * ncols + ncols + N * 2 * N + B * N
                          + 2 * B * N * M + T * B * N)

    w_all, new_mem = pl.pallas_call(
        kernel,
        out_shape=(jax.ShapeDtypeStruct((T, B, N), jnp.float32),
                   jax.ShapeDtypeStruct((B, N, M), jnp.float32)),
        grid_spec=pltpu.PrefetchScalarGridSpec(
            num_scalar_prefetch=0,
            grid=(T,),
            in_specs=[
                pl.BlockSpec((1, B, C), lambda t: (t, 0, 0)),     # streamed per step
                pl.BlockSpec((C, ncols), lambda t: (0, 0)),       # fetched once
                pl.BlockSpec((1, ncols), lambda t: (0, 0)),
                pl.BlockSpec((N, 2 * N), lambda t: (0, 0)),
                pl.BlockSpec((B, N), lambda t: (0, 0)),
                pl.BlockSpec((B, N, M), lambda t: (0, 0, 0)),
            ],
            out_specs=[
                pl.BlockSpec((1, B, N), lambda t: (t, 0, 0)),     # per-step w_t
                pl.BlockSpec((B, N, M), lambda t: (0, 0, 0)),     # VMEM accumulator
            ],
            scratch_shapes=[pltpu.VMEM((B, N), jnp.float32)],     # prev_w carry
        ),
        # T steps are sequentially dependent through memory/prev_w.
        # (If B grows, add a leading "parallel" batch grid axis here for v7x's 2 TCs.)
        compiler_params=pltpu.CompilerParams(dimension_semantics=("arbitrary",)),
        cost_estimate=pl.CostEstimate(flops=flops,
                                      transcendentals=transcendentals,
                                      bytes_accessed=bytes_accessed),
        # memory (operand 5) is rewritten -> update in place (donated at jit level).
        input_output_aliases={5: 1},
    )(controller_outs, Wf, bf, shift_mat, prev_w, mem)
    return w_all, new_mem


def _reference(controller_outs, waT, ba, wwT, bw, prev_w, mem):
    """Pure-JAX per-step reference of the module semantics, for correctness."""
    eps = 1e-16
    M = mem.shape[-1]
    w, m, ws = prev_w, mem, []
    for t in range(controller_outs.shape[0]):
        x = controller_outs[t]
        params = x @ waT + ba
        k, beta, g, s, gamma = (params[:, :M], params[:, M:M + 1], params[:, M + 1:M + 2],
                                params[:, M + 2:M + 5], params[:, M + 5:M + 6])
        beta = jax.nn.softplus(beta)
        g = jax.nn.sigmoid(g)
        s = jax.nn.softmax(s, axis=-1)
        gamma = jax.nn.relu(gamma) + 1.0
        dot = jnp.einsum('bm,bnm->bn', k, m)
        sim = dot / (jnp.linalg.norm(k, axis=-1, keepdims=True)
                     * jnp.linalg.norm(m, axis=-1) + eps)
        w_c = jax.nn.softmax(beta * sim, axis=-1)
        w_g = g * w_c + (1.0 - g) * w
        w_tilde = (s[:, 0:1] * jnp.roll(w_g, -1, axis=1)
                   + s[:, 1:2] * w_g
                   + s[:, 2:3] * jnp.roll(w_g, 1, axis=1))
        w_pow = (w_tilde + eps) ** gamma
        w_t = w_pow / jnp.sum(w_pow, axis=-1, keepdims=True)
        wr = x @ wwT + bw
        e_t = jax.nn.sigmoid(wr[:, :M])
        a_t = wr[:, M:]
        m = m * (1.0 - w_t[:, :, None] * e_t[:, None, :]) + w_t[:, :, None] * a_t[:, None, :]
        ws.append(w_t)
        w = w_t
    return jnp.stack(ws, axis=0), m


def _xavier_uniform(key, fan_out, fan_in):
    bound = (6.0 / (fan_in + fan_out)) ** 0.5
    # PyTorch weight is [out, in]; return the transpose [in, out] for x @ W^T.
    w = jax.random.uniform(key, (fan_out, fan_in), jnp.float32, -bound, bound)
    return w.T


if __name__ == "__main__":
    T, B, C, N, M = 4, 2, 32, 8, 16   # steps, batch, controller_size, memory.N, memory.M

    key = jax.random.PRNGKey(0)
    k1, k2, k3, k4 = jax.random.split(key, 4)

    waT = _xavier_uniform(k1, M + 1 + 1 + 3 + 1, C)        # address_param_decoder
    ba = jnp.zeros((M + 6,), jnp.float32)
    wwT = _xavier_uniform(k2, 2 * M, C)                    # writer_decoder
    bw = jnp.zeros((2 * M,), jnp.float32)

    controller_outs = jax.random.normal(k3, (T, B, C), jnp.float32)
    mem = 0.1 * jax.random.normal(k4, (B, N, M), jnp.float32)
    prev_w = jnp.ones((B, N), jnp.float32) / N             # Head.reset(batch_size)

    # Reference FIRST: `mem` is donated to (and overwritten by) the kernel call.
    w_ref, mem_ref_out = _reference(controller_outs, waT, ba, wwT, bw, prev_w, mem)
    w_ref, mem_ref_out = jax.block_until_ready((w_ref, mem_ref_out))

    w_all, new_mem = writer_forward(controller_outs, waT, ba, wwT, bw, prev_w, mem)
    jax.block_until_ready((w_all, new_mem))

    assert jnp.allclose(w_all, w_ref, atol=1e-5, rtol=1e-5)
    assert jnp.allclose(new_mem, mem_ref_out, atol=1e-5, rtol=1e-5)
    print("KERNEL_OK")
</pallas_src>

<mosaic_0001>
module attributes {stable_mosaic.version = 11 : i64} {
  func.func @kernel(%arg0: i32, %arg1: memref<1x2x32xf32, #tpu.memory_space<vmem>>, %arg2: memref<32x56xf32, #tpu.memory_space<vmem>>, %arg3: memref<1x56xf32, #tpu.memory_space<vmem>>, %arg4: memref<8x16xf32, #tpu.memory_space<vmem>>, %arg5: memref<2x8xf32, #tpu.memory_space<vmem>>, %arg6: memref<2x8x16xf32, #tpu.memory_space<vmem>>, %arg7: memref<1x2x8xf32, #tpu.memory_space<vmem>>, %arg8: memref<2x8x16xf32, #tpu.memory_space<vmem>>, %arg9: memref<2x8xf32, #tpu.memory_space<vmem>>) attributes {dimension_semantics = [#tpu.dimension_semantics<arbitrary>], iteration_bounds = array<i64: 4>, scalar_prefetch = 0 : i64, scratch_operands = 1 : i64, tpu.core_type = #tpu.core_type<tc>, window_params = [{transform_indices = @transform_0, window_bounds = array<i64: 1, 2, 32>}, {pipeline_mode = #tpu.pipeline_mode<synchronous>, transform_indices = @transform_1, window_bounds = array<i64: 32, 56>}, {pipeline_mode = #tpu.pipeline_mode<synchronous>, transform_indices = @transform_2, window_bounds = array<i64: 1, 56>}, {pipeline_mode = #tpu.pipeline_mode<synchronous>, transform_indices = @transform_3, window_bounds = array<i64: 8, 16>}, {pipeline_mode = #tpu.pipeline_mode<synchronous>, transform_indices = @transform_4, window_bounds = array<i64: 2, 8>}, {pipeline_mode = #tpu.pipeline_mode<synchronous>, transform_indices = @transform_5, window_bounds = array<i64: 2, 8, 16>}, {transform_indices = @transform_6, window_bounds = array<i64: 1, 2, 8>}, {pipeline_mode = #tpu.pipeline_mode<synchronous>, transform_indices = @transform_7, window_bounds = array<i64: 2, 8, 16>}]} {
    %c0_i32 = arith.constant 0 : i32
    %0 = arith.cmpi eq, %arg0, %c0_i32 : i32
    %1 = arith.extui %0 : i1 to i32
    %c0_i32_0 = arith.constant 0 : i32
    %2 = arith.cmpi ne, %1, %c0_i32_0 : i32
    scf.if %2 {
      %c0_42 = arith.constant 0 : index
      %c0_43 = arith.constant 0 : index
      %c0_44 = arith.constant 0 : index
      %129 = vector.load %arg6[%c0_42, %c0_43, %c0_44] : memref<2x8x16xf32, #tpu.memory_space<vmem>>, vector<2x8x16xf32>
      %c0_45 = arith.constant 0 : index
      %c0_46 = arith.constant 0 : index
      %c0_47 = arith.constant 0 : index
      %130 = vector.load %arg8[%c0_45, %c0_46, %c0_47] : memref<2x8x16xf32, #tpu.memory_space<vmem>>, vector<2x8x16xf32>
      tpu.vector_store %arg8[%c0_45, %c0_46, %c0_47], %129 {strides = array<i32>} : memref<2x8x16xf32, #tpu.memory_space<vmem>>, vector<2x8x16xf32>,
      %c0_48 = arith.constant 0 : index
      %c0_49 = arith.constant 0 : index
      %131 = vector.load %arg5[%c0_48, %c0_49] : memref<2x8xf32, #tpu.memory_space<vmem>>, vector<2x8xf32>
      %c0_50 = arith.constant 0 : index
      %c0_51 = arith.constant 0 : index
      %132 = vector.load %arg9[%c0_50, %c0_51] : memref<2x8xf32, #tpu.memory_space<vmem>>, vector<2x8xf32>
      tpu.vector_store %arg9[%c0_50, %c0_51], %131 {strides = array<i32>} : memref<2x8xf32, #tpu.memory_space<vmem>>, vector<2x8xf32>,
    } else {
    }
    %c0 = arith.constant 0 : index
    %c0_1 = arith.constant 0 : index
    %c0_2 = arith.constant 0 : index
    %3 = vector.load %arg1[%c0, %c0_1, %c0_2] : memref<1x2x32xf32, #tpu.memory_space<vmem>>, vector<1x2x32xf32>
    %4 = vector.shape_cast %3 : vector<1x2x32xf32> to vector<2x32xf32>
    %c0_3 = arith.constant 0 : index
    %c0_4 = arith.constant 0 : index
    %c0_5 = arith.constant 0 : index
    %5 = vector.load %arg8[%c0_3, %c0_4, %c0_5] : memref<2x8x16xf32, #tpu.memory_space<vmem>>, vector<2x8x16xf32>
    %c0_6 = arith.constant 0 : index
    %c0_7 = arith.constant 0 : index
    %6 = vector.load %arg9[%c0_6, %c0_7] : memref<2x8xf32, #tpu.memory_space<vmem>>, vector<2x8xf32>
    %c0_8 = arith.constant 0 : index
    %c0_9 = arith.constant 0 : index
    %7 = vector.load %arg2[%c0_8, %c0_9] : memref<32x56xf32, #tpu.memory_space<vmem>>, vector<32x56xf32>
    %cst = arith.constant dense<0.000000e+00> : vector<2x56xf32>
    %8 = tpu.matmul %4, %7, %cst {dimension_numbers = #tpu.dot_dimension_numbers<[1], [0], [0], [1], [0, 0, 1, 1], [], []>} : vector<2x32xf32>, vector<32x56xf32>, vector<2x56xf32> -> vector<2x56xf32>
    %c0_10 = arith.constant 0 : index
    %c0_11 = arith.constant 0 : index
    %9 = vector.load %arg3[%c0_10, %c0_11] : memref<1x56xf32, #tpu.memory_space<vmem>>, vector<1x56xf32>
    %10 = vector.broadcast %9 : vector<1x56xf32> to vector<2x56xf32>
    %11 = arith.addf %8, %10 : vector<2x56xf32>
    %12 = vector.extract_strided_slice %11 {offsets = [0, 0], sizes = [2, 16], strides = [1, 1]} : vector<2x56xf32> to vector<2x16xf32>
    %13 = vector.extract_strided_slice %11 {offsets = [0, 16], sizes = [2, 17], strides = [1, 1]} : vector<2x56xf32> to vector<2x17xf32>
    %cst_12 = arith.constant 0.000000e+00 : f32
    %14 = vector.broadcast %cst_12 : f32 to vector<2x17xf32>
    %15 = arith.subf %14, %13 : vector<2x17xf32>
    %16 = math.exp %15 : vector<2x17xf32>
    %cst_13 = arith.constant 1.000000e+00 : f32
    %17 = vector.broadcast %cst_13 : f32 to vector<2x17xf32>
    %18 = arith.addf %17, %16 : vector<2x17xf32>
    %19 = tpu.reciprocal %18 : vector<2x17xf32> -> vector<2x17xf32>
    %20 = vector.extract_strided_slice %19 {offsets = [0, 0], sizes = [2, 16], strides = [1, 1]} : vector<2x17xf32> to vector<2x16xf32>
    %21 = vector.extract_strided_slice %19 {offsets = [0, 16], sizes = [2, 1], strides = [1, 1]} : vector<2x17xf32> to vector<2x1xf32>
    %22 = vector.extract_strided_slice %11 {offsets = [0, 33], sizes = [2, 1], strides = [1, 1]} : vector<2x56xf32> to vector<2x1xf32>
    %cst_14 = arith.constant 0.000000e+00 : f32
    %23 = vector.broadcast %cst_14 : f32 to vector<2x1xf32>
    %24 = arith.maximumf %22, %23 : vector<2x1xf32>
    %25 = math.absf %22 : vector<2x1xf32>
    %cst_15 = arith.constant 0.000000e+00 : f32
    %26 = vector.broadcast %cst_15 : f32 to vector<2x1xf32>
    %27 = arith.subf %26, %25 : vector<2x1xf32>
    %28 = math.exp %27 : vector<2x1xf32>
    %cst_16 = arith.constant 1.000000e+00 : f32
    %29 = vector.broadcast %cst_16 : f32 to vector<2x1xf32>
    %30 = arith.addf %29, %28 : vector<2x1xf32>
    %31 = math.log %30 : vector<2x1xf32>
    %32 = arith.addf %24, %31 : vector<2x1xf32>
    %33 = vector.extract_strided_slice %11 {offsets = [0, 34], sizes = [2, 3], strides = [1, 1]} : vector<2x56xf32> to vector<2x3xf32>
    %34 = vector.extract_strided_slice %11 {offsets = [0, 37], sizes = [2, 1], strides = [1, 1]} : vector<2x56xf32> to vector<2x1xf32>
    %cst_17 = arith.constant 0.000000e+00 : f32
    %35 = vector.broadcast %cst_17 : f32 to vector<2x1xf32>
    %36 = arith.maximumf %34, %35 : vector<2x1xf32>
    %cst_18 = arith.constant 1.000000e+00 : f32
    %37 = vector.broadcast %cst_18 : f32 to vector<2x1xf32>
    %38 = arith.addf %36, %37 : vector<2x1xf32>
    %39 = vector.extract_strided_slice %11 {offsets = [0, 40], sizes = [2, 16], strides = [1, 1]} : vector<2x56xf32> to vector<2x16xf32>
    %cst_19 = arith.constant dense<0xFF800000> : vector<2xf32>
    %40 = vector.multi_reduction <maximumf>, %33, %cst_19 [1] : vector<2x3xf32> to vector<2xf32>
    %41 = vector.shape_cast %40 : vector<2xf32> to vector<2x1xf32>
    %42 = vector.broadcast %41 : vector<2x1xf32> to vector<2x3xf32>
    %43 = arith.subf %33, %42 : vector<2x3xf32>
    %44 = math.exp %43 : vector<2x3xf32>
    %cst_20 = arith.constant dense<0.000000e+00> : vector<2xf32>
    %45 = vector.multi_reduction <add>, %44, %cst_20 [1] : vector<2x3xf32> to vector<2xf32>
    %46 = vector.shape_cast %45 : vector<2xf32> to vector<2x1xf32>
    %47 = tpu.reciprocal %46 : vector<2x1xf32> -> vector<2x1xf32>
    %48 = vector.broadcast %47 : vector<2x1xf32> to vector<2x3xf32>
    %49 = arith.mulf %44, %48 : vector<2x3xf32>
    %50 = vector.shape_cast %12 : vector<2x16xf32> to vector<2x1x16xf32>
    %51 = vector.broadcast %50 : vector<2x1x16xf32> to vector<2x8x16xf32>
    %52 = arith.mulf %51, %5 : vector<2x8x16xf32>
    %cst_21 = arith.constant dense<0.000000e+00> : vector<2x8xf32>
    %53 = vector.multi_reduction <add>, %52, %cst_21 [2] : vector<2x8x16xf32> to vector<2x8xf32>
    %54 = arith.mulf %12, %12 : vector<2x16xf32>
    %cst_22 = arith.constant dense<0.000000e+00> : vector<2xf32>
    %55 = vector.multi_reduction <add>, %54, %cst_22 [1] : vector<2x16xf32> to vector<2xf32>
    %56 = vector.shape_cast %55 : vector<2xf32> to vector<2x1xf32>
    %57 = arith.mulf %5, %5 : vector<2x8x16xf32>
    %cst_23 = arith.constant dense<0.000000e+00> : vector<2x8xf32>
    %58 = vector.multi_reduction <add>, %57, %cst_23 [2] : vector<2x8x16xf32> to vector<2x8xf32>
    %59 = vector.broadcast %56 : vector<2x1xf32> to vector<2x8xf32>
    %60 = arith.mulf %59, %58 : vector<2x8xf32>
    %cst_24 = arith.constant 1.000000e-30 : f32
    %61 = vector.broadcast %cst_24 : f32 to vector<2x8xf32>
    %62 = arith.addf %60, %61 : vector<2x8xf32>
    %63 = math.rsqrt %62 : vector<2x8xf32>
    %64 = arith.mulf %53, %63 : vector<2x8xf32>
    %65 = vector.broadcast %32 : vector<2x1xf32> to vector<2x8xf32>
    %66 = arith.mulf %65, %64 : vector<2x8xf32>
    %cst_25 = arith.constant dense<0xFF800000> : vector<2xf32>
    %67 = vector.multi_reduction <maximumf>, %66, %cst_25 [1] : vector<2x8xf32> to vector<2xf32>
    %68 = vector.shape_cast %67 : vector<2xf32> to vector<2x1xf32>
    %69 = vector.broadcast %68 : vector<2x1xf32> to vector<2x8xf32>
    %70 = arith.subf %66, %69 : vector<2x8xf32>
    %71 = math.exp %70 : vector<2x8xf32>
    %cst_26 = arith.constant dense<0.000000e+00> : vector<2xf32>
    %72 = vector.multi_reduction <add>, %71, %cst_26 [1] : vector<2x8xf32> to vector<2xf32>
    %73 = vector.shape_cast %72 : vector<2xf32> to vector<2x1xf32>
    %74 = tpu.reciprocal %73 : vector<2x1xf32> -> vector<2x1xf32>
    %75 = vector.broadcast %74 : vector<2x1xf32> to vector<2x8xf32>
    %76 = arith.mulf %71, %75 : vector<2x8xf32>
    %77 = vector.broadcast %21 : vector<2x1xf32> to vector<2x8xf32>
    %78 = arith.mulf %77, %76 : vector<2x8xf32>
    %cst_27 = arith.constant 1.000000e+00 : f32
    %79 = vector.broadcast %cst_27 : f32 to vector<2x1xf32>
    %80 = arith.subf %79, %21 : vector<2x1xf32>
    %81 = vector.broadcast %80 : vector<2x1xf32> to vector<2x8xf32>
    %82 = arith.mulf %81, %6 : vector<2x8xf32>
    %83 = arith.addf %78, %82 : vector<2x8xf32>
    %c0_28 = arith.constant 0 : index
    %c0_29 = arith.constant 0 : index
    %84 = vector.load %arg4[%c0_28, %c0_29] : memref<8x16xf32, #tpu.memory_space<vmem>>, vector<8x16xf32>
    %cst_30 = arith.constant dense<0.000000e+00> : vector<2x16xf32>
    %85 = tpu.matmul %83, %84, %cst_30 {dimension_numbers = #tpu.dot_dimension_numbers<[1], [0], [0], [1], [0, 0, 1, 1], [], []>} : vector<2x8xf32>, vector<8x16xf32>, vector<2x16xf32> -> vector<2x16xf32>
    %86 = vector.extract_strided_slice %85 {offsets = [0, 0], sizes = [2, 8], strides = [1, 1]} : vector<2x16xf32> to vector<2x8xf32>
    %87 = vector.extract_strided_slice %85 {offsets = [0, 8], sizes = [2, 8], strides = [1, 1]} : vector<2x16xf32> to vector<2x8xf32>
    %88 = vector.extract_strided_slice %49 {offsets = [0, 0], sizes = [2, 1], strides = [1, 1]} : vector<2x3xf32> to vector<2x1xf32>
    %89 = vector.broadcast %88 : vector<2x1xf32> to vector<2x8xf32>
    %90 = arith.mulf %89, %86 : vector<2x8xf32>
    %91 = vector.extract_strided_slice %49 {offsets = [0, 1], sizes = [2, 1], strides = [1, 1]} : vector<2x3xf32> to vector<2x1xf32>
    %92 = vector.broadcast %91 : vector<2x1xf32> to vector<2x8xf32>
    %93 = arith.mulf %92, %83 : vector<2x8xf32>
    %94 = arith.addf %90, %93 : vector<2x8xf32>
    %95 = vector.extract_strided_slice %49 {offsets = [0, 2], sizes = [2, 1], strides = [1, 1]} : vector<2x3xf32> to vector<2x1xf32>
    %96 = vector.broadcast %95 : vector<2x1xf32> to vector<2x8xf32>
    %97 = arith.mulf %96, %87 : vector<2x8xf32>
    %98 = arith.addf %94, %97 : vector<2x8xf32>
    %cst_31 = arith.constant 1.000000e-16 : f32
    %99 = vector.broadcast %cst_31 : f32 to vector<2x8xf32>
    %100 = arith.addf %98, %99 : vector<2x8xf32>
    %101 = math.log %100 : vector<2x8xf32>
    %102 = vector.broadcast %38 : vector<2x1xf32> to vector<2x8xf32>
    %103 = arith.mulf %102, %101 : vector<2x8xf32>
    %104 = math.exp %103 : vector<2x8xf32>
    %cst_32 = arith.constant dense<0.000000e+00> : vector<2xf32>
    %105 = vector.multi_reduction <add>, %104, %cst_32 [1] : vector<2x8xf32> to vector<2xf32>
    %106 = vector.shape_cast %105 : vector<2xf32> to vector<2x1xf32>
    %107 = tpu.reciprocal %106 : vector<2x1xf32> -> vector<2x1xf32>
    %108 = vector.broadcast %107 : vector<2x1xf32> to vector<2x8xf32>
    %109 = arith.mulf %104, %108 : vector<2x8xf32>
    %110 = vector.shape_cast %109 : vector<2x8xf32> to vector<2x8x1xf32>
    %111 = vector.shape_cast %20 : vector<2x16xf32> to vector<2x1x16xf32>
    %112 = vector.broadcast %110 : vector<2x8x1xf32> to vector<2x8x16xf32>
    %113 = vector.broadcast %111 : vector<2x1x16xf32> to vector<2x8x16xf32>
    %114 = arith.mulf %112, %113 : vector<2x8x16xf32>
    %115 = vector.shape_cast %109 : vector<2x8xf32> to vector<2x8x1xf32>
    %116 = vector.shape_cast %39 : vector<2x16xf32> to vector<2x1x16xf32>
    %117 = vector.broadcast %115 : vector<2x8x1xf32> to vector<2x8x16xf32>
    %118 = vector.broadcast %116 : vector<2x1x16xf32> to vector<2x8x16xf32>
    %119 = arith.mulf %117, %118 : vector<2x8x16xf32>
    %cst_33 = arith.constant 1.000000e+00 : f32
    %120 = vector.broadcast %cst_33 : f32 to vector<2x8x16xf32>
    %121 = arith.subf %120, %114 : vector<2x8x16xf32>
    %122 = arith.mulf %5, %121 : vector<2x8x16xf32>
    %123 = arith.addf %122, %119 : vector<2x8x16xf32>
    %c0_34 = arith.constant 0 : index
    %c0_35 = arith.constant 0 : index
    %c0_36 = arith.constant 0 : index
    %124 = vector.load %arg8[%c0_34, %c0_35, %c0_36] : memref<2x8x16xf32, #tpu.memory_space<vmem>>, vector<2x8x16xf32>
    tpu.vector_store %arg8[%c0_34, %c0_35, %c0_36], %123 {strides = array<i32>} : memref<2x8x16xf32, #tpu.memory_space<vmem>>, vector<2x8x16xf32>,
    %c0_37 = arith.constant 0 : index
    %c0_38 = arith.constant 0 : index
    %125 = vector.load %arg9[%c0_37, %c0_38] : memref<2x8xf32, #tpu.memory_space<vmem>>, vector<2x8xf32>
    tpu.vector_store %arg9[%c0_37, %c0_38], %109 {strides = array<i32>} : memref<2x8xf32, #tpu.memory_space<vmem>>, vector<2x8xf32>,
    %c0_39 = arith.constant 0 : index
    %c0_40 = arith.constant 0 : index
    %c0_41 = arith.constant 0 : index
    %126 = vector.load %arg7[%c0_39, %c0_40, %c0_41] : memref<1x2x8xf32, #tpu.memory_space<vmem>>, vector<1x2x8xf32>
    %127 = vector.shape_cast %126 : vector<1x2x8xf32> to vector<2x8xf32>
    %128 = vector.shape_cast %109 : vector<2x8xf32> to vector<1x2x8xf32>
    tpu.vector_store %arg7[%c0_39, %c0_40, %c0_41], %128 {strides = array<i32>} : memref<1x2x8xf32, #tpu.memory_space<vmem>>, vector<1x2x8xf32>,
    return
  }
  func.func @transform_0(%arg0: i32) -> (i32, i32, i32) {
    %c0_i32 = arith.constant 0 : i32
    %c0_i32_0 = arith.constant 0 : i32
    %c0_i32_1 = arith.constant 0 : i32
    return %arg0, %c0_i32, %c0_i32_0 : i32, i32, i32
  }
  func.func @transform_1(%arg0: i32) -> (i32, i32) {
    %c0_i32 = arith.constant 0 : i32
    %c0_i32_0 = arith.constant 0 : i32
    %c0_i32_1 = arith.constant 0 : i32
    return %c0_i32, %c0_i32_0 : i32, i32
  }
  func.func @transform_2(%arg0: i32) -> (i32, i32) {
    %c0_i32 = arith.constant 0 : i32
    %c0_i32_0 = arith.constant 0 : i32
    %c0_i32_1 = arith.constant 0 : i32
    return %c0_i32, %c0_i32_0 : i32, i32
  }
  func.func @transform_3(%arg0: i32) -> (i32, i32) {
    %c0_i32 = arith.constant 0 : i32
    %c0_i32_0 = arith.constant 0 : i32
    %c0_i32_1 = arith.constant 0 : i32
    return %c0_i32, %c0_i32_0 : i32, i32
  }
  func.func @transform_4(%arg0: i32) -> (i32, i32) {
    %c0_i32 = arith.constant 0 : i32
    %c0_i32_0 = arith.constant 0 : i32
    %c0_i32_1 = arith.constant 0 : i32
    return %c0_i32, %c0_i32_0 : i32, i32
  }
  func.func @transform_5(%arg0: i32) -> (i32, i32, i32) {
    %c0_i32 = arith.constant 0 : i32
    %c0_i32_0 = arith.constant 0 : i32
    %c0_i32_1 = arith.constant 0 : i32
    %c0_i32_2 = arith.constant 0 : i32
    return %c0_i32, %c0_i32_0, %c0_i32_1 : i32, i32, i32
  }
  func.func @transform_6(%arg0: i32) -> (i32, i32, i32) {
    %c0_i32 = arith.constant 0 : i32
    %c0_i32_0 = arith.constant 0 : i32
    %c0_i32_1 = arith.constant 0 : i32
    return %arg0, %c0_i32, %c0_i32_0 : i32, i32, i32
  }
  func.func @transform_7(%arg0: i32) -> (i32, i32, i32) {
    %c0_i32 = arith.constant 0 : i32
    %c0_i32_0 = arith.constant 0 : i32
    %c0_i32_1 = arith.constant 0 : i32
    %c0_i32_2 = arith.constant 0 : i32
    return %c0_i32, %c0_i32_0, %c0_i32_1 : i32, i32, i32
  }
}

</mosaic_0001>

<llo_original>
// kernel: writer_forward.1
$region0: #{writer_forward.1}
  #allocation0 [shape = 'u32[]', space=smem, size = 0x4, offset = 0x4, fixed_abs, tag = 'smem constant byte address 0x4 - core index']
  #allocation1 [shape = 'u32[144,128]{1,0:T(1,128)}', space=vmem, size = 0x12000, scoped, tag = 'internal scratch']
  #allocation2 [shape = 'f32[2,8]{1,0:T(2,128)}', space=vmem, size = 0x400, scoped, tag = 'scratch operand']
  %s0 = inlined_call_operand.vmem [shape: f32[4,2,32], index: 0, kind: input, shape index: {}]
  %s1 = inlined_call_operand.vmem [shape: f32[32,56], index: 1, kind: input, shape index: {}]
  %s2 = inlined_call_operand.vmem [shape: f32[1,56], index: 2, kind: input, shape index: {}]
  %s3 = inlined_call_operand.vmem [shape: f32[8,16], index: 3, kind: input, shape index: {}]
  %s4 = inlined_call_operand.vmem [shape: f32[2,8], index: 4, kind: input, shape index: {}]
  %s5 = inlined_call_operand.hbm [shape: f32[2,8,16], index: 5, kind: input, shape index: {}, may-alias: {5,7}]
  %s6 = inlined_call_operand.hbm [shape: f32[4,2,8], index: 6, kind: output, shape index: {0}]
  %s7 = inlined_call_operand.hbm [shape: f32[2,8,16], index: 7, kind: output, shape index: {1}, may-alias: {5,7}]
  %8 = xla_tuple %s6, %s7
  %s9 = sld [smem:[#allocation0]]
  $region73: #{writer_forward.1} parent=0
    _
  %s11 = ssub.s32 1, %s9
  %s12 = scalar_select 0, %s11, %s9
  $region1: #{writer_forward.1} parent=0
    #allocation3 [shape = 'u8[8192]{0}', space=vmem, size = 0x2000, scoped, tag = 'input window, operand 5, single buffered']
    #allocation4 [shape = 's32[2]{0}', space=sflag, size = 0x8, scoped, tag = 'scoped memory for writer_forward.1']
    #allocation5 [shape = 's32[2]{0}', space=sflag, size = 0x8, scoped, tag = 'scoped memory for writer_forward.1']
    #allocation6 [shape = 'u8[2048]{0}', space=vmem, size = 0x800, scoped, tag = 'output window, operand 0']
    #allocation7 [shape = 'u8[8192]{0}', space=vmem, size = 0x2000, scoped, tag = 'output window, operand 1, single buffered']
    #allocation8 [shape = 's32[1]{0}', space=sflag, size = 0x4, scoped, tag = 'scoped memory for writer_forward.1']
    %13 = vsyncpa [#allocation4], 0
    %14 = vsyncpa [#allocation5], 0
    %s15 = scalar_lea.sflag [#allocation5], 1
    %16 = vsyncpa %s15, 0
    %17 = vsyncpa [#allocation8], 0
    loop: start=0, step=1, limit=6
    $region2: #{writer_forward.1} parent=1 // loop_pre_header
      _
    $region3: #{writer_forward.1} parent=1 // loop_header
      %s19 = sphi 0, %s23
      %p20 = scmp.ge.s32.totalorder %s19, 6
      %s29 = sphi 0, %s31
      %s32 = sphi 0, %s29
      %s33 = sphi 0, %s32
      %s49 = sphi 0, %s33
      %s53 = sphi 0, %s53
      %s55 = sphi 0, %s53
      %s56 = sphi 0, %s55
      %s70 = sphi 0, %s56
      %s74 = sphi 0, %s74
      %s76 = sphi 0, %s74
      %s77 = sphi 0, %s76
      %s91 = sphi 0, %s77
      %s95 = sphi 0, %s95
      %s97 = sphi 0, %s95
      %s98 = sphi 0, %s97
      %s112 = sphi 0, %s98
      %s116 = sphi 0, %s116
      %s118 = sphi 0, %s116
      %s119 = sphi 0, %s118
      %s133 = sphi 0, %s119
      %s137 = sphi 0, %s137
      %s139 = sphi 0, %s137
      %s140 = sphi 0, %s139
      %s154 = sphi 0, %s140
      %s160 = sphi 0, %s162
      %s163 = sphi 0, %s160
      %s164 = sphi 0, %s163
      %s180 = sphi 0, %s164
      %s184 = sphi 0, %s184
      %s186 = sphi 0, %s184
      %s187 = sphi 0, %s186
      %s201 = sphi 0, %s187
    $region4: #{writer_forward.1} parent=1 // loop_header_branch
      %22 = sbr.rel (%p20) target = $region8
    $region5: #{writer_forward.1} parent=1 // loop_body
      %s24 = ssub.s32 %s19, 1
      %s25 = ssub.s32 %s19, 2
      %s26 = sadd.s32 %s19, 1
      %s27 = ssub.s32 %s19, %s26
      %p28 = scmp.eq.s32.totalorder %s27, 0
      %s30 = sadd.s32 %s29, 1
      %s31 = scalar_select %p28, %s29, %s30
      %p34 = pneg %p28
      %p35 = scmp.eq.s32.totalorder %s19, 3
      %p36 = por %p34, %p35
      %p37 = scmp.ne.s32.totalorder %s29, %s32
      %p38 = scmp.eq.s32.totalorder %s19, 0
      %p39 = por %p37, %p38
      %p40 = scmp.ne.s32.totalorder %s29, %s32
      %p41 = scmp.eq.s32.totalorder %s24, 3
      %p42 = por %p40, %p41
      %p43 = scmp.ne.s32.totalorder %s32, %s33
      %p44 = scmp.eq.s32.totalorder %s24, 0
      %p45 = por %p43, %p44
      %p46 = scmp.ne.s32.totalorder %s32, %s33
      %p47 = scmp.eq.s32.totalorder %s25, 3
      %p48 = por %p46, %p47
      %p50 = scmp.ne.s32.totalorder %s33, %s49
      %p51 = scmp.eq.s32.totalorder %s25, 0
      %p52 = por %p50, %p51
      %s54 = sadd.s32 %s53, 1
      %p57 = scmp.eq.s32.totalorder %s19, 3
      %p58 = scmp.ne.s32.totalorder %s53, %s55
      %p59 = scmp.eq.s32.totalorder %s19, 0
      %p60 = por %p58, %p59
      %p61 = scmp.ne.s32.totalorder %s53, %s55
      %p62 = scmp.eq.s32.totalorder %s24, 3
      %p63 = por %p61, %p62
      %p64 = scmp.ne.s32.totalorder %s55, %s56
      %p65 = scmp.eq.s32.totalorder %s24, 0
      %p66 = por %p64, %p65
      %p67 = scmp.ne.s32.totalorder %s55, %s56
      %p68 = scmp.eq.s32.totalorder %s25, 3
      %p69 = por %p67, %p68
      %p71 = scmp.ne.s32.totalorder %s56, %s70
      %p72 = scmp.eq.s32.totalorder %s25, 0
      %p73 = por %p71, %p72
      %s75 = sadd.s32 %s74, 1
      %p78 = scmp.eq.s32.totalorder %s19, 3
      %p79 = scmp.ne.s32.totalorder %s74, %s76
      %p80 = scmp.eq.s32.totalorder %s19, 0
      %p81 = por %p79, %p80
      %p82 = scmp.ne.s32.totalorder %s74, %s76
      %p83 = scmp.eq.s32.totalorder %s24, 3
      %p84 = por %p82, %p83
      %p85 = scmp.ne.s32.totalorder %s76, %s77
      %p86 = scmp.eq.s32.totalorder %s24, 0
      %p87 = por %p85, %p86
      %p88 = scmp.ne.s32.totalorder %s76, %s77
      %p89 = scmp.eq.s32.totalorder %s25, 3
      %p90 = por %p88, %p89
      %p92 = scmp.ne.s32.totalorder %s77, %s91
      %p93 = scmp.eq.s32.totalorder %s25, 0
      %p94 = por %p92, %p93
      %s96 = sadd.s32 %s95, 1
      %p99 = scmp.eq.s32.totalorder %s19, 3
      %p100 = scmp.ne.s32.totalorder %s95, %s97
      %p101 = scmp.eq.s32.totalorder %s19, 0
      %p102 = por %p100, %p101
      %p103 = scmp.ne.s32.totalorder %s95, %s97
      %p104 = scmp.eq.s32.totalorder %s24, 3
      %p105 = por %p103, %p104
      %p106 = scmp.ne.s32.totalorder %s97, %s98
      %p107 = scmp.eq.s32.totalorder %s24, 0
      %p108 = por %p106, %p107
      %p109 = scmp.ne.s32.totalorder %s97, %s98
      %p110 = scmp.eq.s32.totalorder %s25, 3
      %p111 = por %p109, %p110
      %p113 = scmp.ne.s32.totalorder %s98, %s112
      %p114 = scmp.eq.s32.totalorder %s25, 0
      %p115 = por %p113, %p114
      %s117 = sadd.s32 %s116, 1
      %p120 = scmp.eq.s32.totalorder %s19, 3
      %p121 = scmp.ne.s32.totalorder %s116, %s118
      %p122 = scmp.eq.s32.totalorder %s19, 0
      %p123 = por %p121, %p122
      %p124 = scmp.ne.s32.totalorder %s116, %s118
      %p125 = scmp.eq.s32.totalorder %s24, 3
      %p126 = por %p124, %p125
      %p127 = scmp.ne.s32.totalorder %s118, %s119
      %p128 = scmp.eq.s32.totalorder %s24, 0
      %p129 = por %p127, %p128
      %p130 = scmp.ne.s32.totalorder %s118, %s119
      %p131 = scmp.eq.s32.totalorder %s25, 3
      %p132 = por %p130, %p131
      %p134 = scmp.ne.s32.totalorder %s119, %s133
      %p135 = scmp.eq.s32.totalorder %s25, 0
      %p136 = por %p134, %p135
      %s138 = sadd.s32 %s137, 1
      %p141 = scmp.eq.s32.totalorder %s19, 3
      %p142 = scmp.ne.s32.totalorder %s137, %s139
      %p143 = scmp.eq.s32.totalorder %s19, 0
      %p144 = por %p142, %p143
      %p145 = scmp.ne.s32.totalorder %s137, %s139
      %p146 = scmp.eq.s32.totalorder %s24, 3
      %p147 = por %p145, %p146
      %p148 = scmp.ne.s32.totalorder %s139, %s140
      %p149 = scmp.eq.s32.totalorder %s24, 0
      %p150 = por %p148, %p149
      %p151 = scmp.ne.s32.totalorder %s139, %s140
      %p152 = scmp.eq.s32.totalorder %s25, 3
      %p153 = por %p151, %p152
      %p155 = scmp.ne.s32.totalorder %s140, %s154
      %p156 = scmp.eq.s32.totalorder %s25, 0
      %p157 = por %p155, %p156
      %s158 = ssub.s32 %s19, %s26
      %p159 = scmp.eq.s32.totalorder %s158, 0
      %s161 = sadd.s32 %s160, 1
      %s162 = scalar_select %p159, %s160, %s161
      %p165 = pneg %p159
      %p166 = scmp.eq.s32.totalorder %s19, 3
      %p167 = por %p165, %p166
      %p168 = scmp.ne.s32.totalorder %s160, %s163
      %p169 = scmp.eq.s32.totalorder %s19, 0
      %p170 = por %p168, %p169
      %p171 = scmp.ne.s32.totalorder %s160, %s163
      %p172 = scmp.eq.s32.totalorder %s24, 3
      %p173 = por %p171, %p172
      %p174 = scmp.ne.s32.totalorder %s163, %s164
      %p175 = scmp.eq.s32.totalorder %s24, 0
      %p176 = por %p174, %p175
      %p177 = scmp.ne.s32.totalorder %s163, %s164
      %p178 = scmp.eq.s32.totalorder %s25, 3
      %p179 = por %p177, %p178
      %p181 = scmp.ne.s32.totalorder %s164, %s180
      %p182 = scmp.eq.s32.totalorder %s25, 0
      %p183 = por %p181, %p182
      %s185 = sadd.s32 %s184, 1
      %p188 = scmp.eq.s32.totalorder %s19, 3
      %p189 = scmp.ne.s32.totalorder %s184, %s186
      %p190 = scmp.eq.s32.totalorder %s19, 0
      %p191 = por %p189, %p190
      %p192 = scmp.ne.s32.totalorder %s184, %s186
      %p193 = scmp.eq.s32.totalorder %s24, 3
      %p194 = por %p192, %p193
      %p195 = scmp.ne.s32.totalorder %s186, %s187
      %p196 = scmp.eq.s32.totalorder %s24, 0
      %p197 = por %p195, %p196
      %p198 = scmp.ne.s32.totalorder %s186, %s187
      %p199 = scmp.eq.s32.totalorder %s25, 3
      %p200 = por %p198, %p199
      %p202 = scmp.ne.s32.totalorder %s187, %s201
      %p203 = scmp.eq.s32.totalorder %s25, 0
      %p204 = por %p202, %p203
      %p205 = scmp.le.s32.totalorder 1, %s19
      %p206 = scmp.lt.s32.totalorder %s19, 5
      %p207 = pnand %p205, %p206
      %p208 = pneg %p207
      // Predicated region
      $region9: #{writer_forward.1} parent=5 // pred_check
        _
      $region10: #{writer_forward.1} parent=5 // pred_check_branch
        %210 = sbr.rel (%p207) target = $region12
      $region11: #{writer_forward.1} parent=5 // pred_region
        %s211 = ssub.s32 %s19, 1
        // Predicated region
        $region13: #{writer_forward.1} parent=11 // pred_check
          %p212 = pneg %p66
        $region14: #{writer_forward.1} parent=11 // pred_check_branch
          %214 = sbr.rel (%p212) target = $region16
        $region15: #{writer_forward.1} parent=11 // pred_region
          _
        $region16: #{writer_forward.1} parent=11 // pred_fallthru
          _
        // Predicated region
        $region17: #{writer_forward.1} parent=11 // pred_check
          %p215 = pneg %p87
        $region18: #{writer_forward.1} parent=11 // pred_check_branch
          %217 = sbr.rel (%p215) target = $region20
        $region19: #{writer_forward.1} parent=11 // pred_region
          _
        $region20: #{writer_forward.1} parent=11 // pred_fallthru
          _
        // Predicated region
        $region21: #{writer_forward.1} parent=11 // pred_check
          %p218 = pneg %p108
        $region22: #{writer_forward.1} parent=11 // pred_check_branch
          %220 = sbr.rel (%p218) target = $region24
        $region23: #{writer_forward.1} parent=11 // pred_region
          _
        $region24: #{writer_forward.1} parent=11 // pred_fallthru
          _
        // Predicated region
        $region25: #{writer_forward.1} parent=11 // pred_check
          %p221 = pneg %p129
        $region26: #{writer_forward.1} parent=11 // pred_check_branch
          %223 = sbr.rel (%p221) target = $region28
        $region27: #{writer_forward.1} parent=11 // pred_region
          _
        $region28: #{writer_forward.1} parent=11 // pred_fallthru
          _
        // Predicated region
        $region29: #{writer_forward.1} parent=11 // pred_check
          %p224 = pneg %p150
        $region30: #{writer_forward.1} parent=11 // pred_check_branch
          %226 = sbr.rel (%p224) target = $region32
        $region31: #{writer_forward.1} parent=11 // pred_region
          %s228 = ssub.s32 256, 256
          %229 = vsyncadd [#allocation4], %s228
          %s230 = sshll.u32 [#allocation3], 4
          %s231 = int_to_ptr.vmem [resolvable:$true] %s230
          %236 = dma.hbm_to_vmem [thread:$0]  %s5, 256, %s231, [#allocation4], 128, 128, 8
        $region32: #{writer_forward.1} parent=11 // pred_fallthru
          _
      $region12: #{writer_forward.1} parent=5 // pred_fallthru
        _
      %p237 = scmp.lt.s32.totalorder %s19, 4
      // Predicated region
      $region33: #{writer_forward.1} parent=5 // pred_check
        %p238 = pneg %p237
      $region34: #{writer_forward.1} parent=5 // pred_check_branch
        %240 = sbr.rel (%p238) target = $region36
      $region35: #{writer_forward.1} parent=5 // pred_region
        // Predicated region
        $region37: #{writer_forward.1} parent=35 // pred_check
          %p241 = pneg %p39
        $region38: #{writer_forward.1} parent=35 // pred_check_branch
          %243 = sbr.rel (%p241) target = $region40
        $region39: #{writer_forward.1} parent=35 // pred_region
          %p244 = scmp.lt.s32.totalorder %s19, 3
          %s245 = scalar_select %p244, %s19, 3
          %s246 = smul.addr %s245, 2
          %s247 = scalar_lea.vmem %s0, %s246
        $region40: #{writer_forward.1} parent=35 // pred_fallthru
          _
      $region36: #{writer_forward.1} parent=5 // pred_fallthru
        _
      %p248 = scmp.le.s32.totalorder 1, %s19
      %p249 = scmp.lt.s32.totalorder %s19, 5
      %p250 = pnand %p248, %p249
      %p251 = pneg %p250
      // Predicated region
      $region41: #{writer_forward.1} parent=5 // pred_check
        _
      $region42: #{writer_forward.1} parent=5 // pred_check_branch
        %253 = sbr.rel (%p250) target = $region44
      $region43: #{writer_forward.1} parent=5 // pred_region
        %s254 = ssub.s32 %s19, 1
        // Predicated region
        $region45: #{writer_forward.1} parent=43 // pred_check
          %p255 = pneg %p150
        $region46: #{writer_forward.1} parent=43 // pred_check_branch
          %257 = sbr.rel (%p255) target = $region48
        $region47: #{writer_forward.1} parent=43 // pred_region
          %258 = dma.done [#allocation4], 256
        $region48: #{writer_forward.1} parent=43 // pred_fallthru
          _
        %p259 = scmp.lt.s32.totalorder %s24, 3
        %s260 = scalar_select %p259, %s24, 3
        %s261 = smul.addr %s260, 2
        %s262 = scalar_lea.vmem %s0, %s261
        %p263 = pneg %p45
        %p264 = pneg %p42
        %p265 = pneg %p66
        %p266 = pneg %p63
        %p267 = pneg %p87
        %p268 = pneg %p84
        %p269 = pneg %p108
        %p270 = pneg %p105
        %p271 = pneg %p129
        %p272 = pneg %p126
        %p273 = pneg %p150
        %p274 = pneg %p147
        %p275 = pneg %p176
        %p276 = pneg %p173
        %s277 = sand.u32 %s163, 1
        %s278 = scalar_lea.sflag [#allocation5], %s277
        %s279 = sand.u32 %s163, 1
        %s280 = smul.addr %s279, 2
        %s281 = scalar_lea.vmem [#allocation6], %s280
        %p282 = pneg %p197
        %p283 = pneg %p194
        %p284 = scmp.lt.s32.totalorder %s24, 3
        %s285 = scalar_select %p284, %s24, 3
        %s286 = smul.addr %s285, 2
        %s287 = scalar_lea.vmem %s0, %s286
        %p288 = scmp.eq.s32.totalorder %s24, 0
        // Predicated region
        $region49: #{writer_forward.1} parent=43 // pred_check
          %p289 = pneg %p288
        $region50: #{writer_forward.1} parent=43 // pred_check_branch
          %291 = sbr.rel (%p289) target = $region52
        $region51: #{writer_forward.1} parent=43 // pred_region
          %v292 = vld [vmem:[#allocation3] sm:$0xff]
          %v293 = vld [vmem:[#allocation3 + $0x8] sm:$0xff]
          %vm294 = vcmask 130048
          %295 = vst.msk [vmem:[#allocation7] sm:$0xff] %vm294, %v292
          %296 = vst.msk [vmem:[#allocation7 + $0x8] sm:$0xff] %vm294, %v293
          %v297 = vld [vmem:[%s4] sm:$0x3]
          %vm298 = vcmask 58368
          %299 = vst.msk [vmem:[#allocation2] sm:$0x3] %vm298, %v297
        $region52: #{writer_forward.1} parent=43 // pred_fallthru
          _
        %v300 = vld [vmem:[%s287] sm:$0x3]
        %v301 = vld [vmem:[#allocation7] sm:$0xff]
        %v302 = vld [vmem:[#allocation7 + $0x8] sm:$0xff]
        %v303 = vld [vmem:[#allocation2] sm:$0x3]
        %v304 = vld [vmem:[%s1] sm:$0xff]
        %v305 = vld [vmem:[%s1 + $0x8] sm:$0xff]
        %v306 = vld [vmem:[%s1 + $0x10] sm:$0xff]
        %v307 = vld [vmem:[%s1 + $0x18] sm:$0xff]
        %v308 = vld [vmem:[%s2] sm:$0x1]
        %v310 = vlaneseq
        %v311 = vshrl.u32 %v310, 7
        %v312 = vsub.s32 0, %v311
        %v313 = vrot.slane %v308, %v312
        %vm315 = vcmask 261120
        %v317 = vsel %vm315, %v300, 0
        %319 = vmatprep.subr.mxu0 0.0
        %320 = vmatpush1.msra.mxu0 %v304
        %321 = vmatprep.subr.mxu0 0.0
        %322 = vmatpush1.msra.mxu0 %v305
        %323 = vmatprep.subr.mxu0 0.0
        %324 = vmatpush1.msra.mxu0 %v306
        %325 = vmatprep.subr.mxu0 0.0
        %326 = vmatpush1.msra.mxu0 %v307
        %327 = vmatprep.subr.mxu0 0.0
        %328 = vmatpush1.msra.mxu0 0.0
        %329 = vmatprep.subr.mxu0 0.0
        %330 = vmatpush1.msra.mxu0 0.0
        %331 = vmatprep.subr.mxu0 0.0
        %332 = vmatpush1.msra.mxu0 0.0
        %333 = vmatprep.subr.mxu0 0.0
        %334 = vmatpush1.msra.mxu0 0.0
        %335 = vmatprep.subr.mxu0 0.0
        %336 = vmatpush1.msra.mxu0 0.0
        %337 = vmatprep.subr.mxu0 0.0
        %338 = vmatpush1.msra.mxu0 0.0
        %339 = vmatprep.subr.mxu0 0.0
        %340 = vmatpush1.msra.mxu0 0.0
        %341 = vmatprep.subr.mxu0 0.0
        %342 = vmatpush1.msra.mxu0 0.0
        %343 = vmatprep.subr.mxu0 0.0
        %344 = vmatpush1.msra.mxu0 0.0
        %345 = vmatprep.subr.mxu0 0.0
        %346 = vmatpush1.msra.mxu0 0.0
        %347 = vmatprep.subr.mxu0 0.0
        %348 = vmatpush1.msra.mxu0 0.0
        %349 = vmatprep.subr.mxu0 0.0
        %350 = vmatpush1.msra.mxu0 0.0
        %351 = vmatprep.subr.mxu0 0.0
        %352 = vmatpush1.msra.mxu0 0.0
        %353 = vmatprep.subr.mxu0 0.0
        %354 = vmatpush1.msra.mxu0 0.0
        %355 = vmatprep.subr.mxu0 0.0
        %356 = vmatpush1.msra.mxu0 0.0
        %357 = vmatprep.subr.mxu0 0.0
        %358 = vmatpush1.msra.mxu0 0.0
        %359 = vmatprep.subr.mxu0 0.0
        %360 = vmatpush1.msra.mxu0 0.0
        %361 = vmatprep.subr.mxu0 0.0
        %362 = vmatpush1.msra.mxu0 0.0
        %363 = vmatprep.subr.mxu0 0.0
        %364 = vmatpush1.msra.mxu0 0.0
        %365 = vmatprep.subr.mxu0 0.0
        %366 = vmatpush1.msra.mxu0 0.0
        %367 = vmatprep.subr.mxu0 0.0
        %368 = vmatpush1.msra.mxu0 0.0
        %369 = vmatprep.subr.mxu0 0.0
        %370 = vmatpush1.msra.mxu0 0.0
        %371 = vmatprep.subr.mxu0 0.0
        %372 = vmatpush1.msra.mxu0 0.0
        %373 = vmatprep.subr.mxu0 0.0
        %374 = vmatpush1.msra.mxu0 0.0
        %375 = vmatprep.subr.mxu0 0.0
        %376 = vmatpush1.msra.mxu0 0.0
        %377 = vmatprep.subr.mxu0 0.0
        %378 = vmatpush1.msra.mxu0 0.0
        %379 = vmatprep.subr.mxu0 0.0
        %380 = vmatpush1.msra.mxu0 0.0
        %381 = vmatprep.subr.mxu0 0.0
        %382 = vmatpush1.msra.mxu0 0.0
        %383 = vmatprep.mubr.f32.mxu0 0.0
        %384 = vmatmul.mubr.f32.gmra.mrb[0].mxu0 %v317
        %v385 = vpop.f32.mrb[0].mxu0
        %v386 = vadd.f32 %v313, %v385
        %v387 = vpop.f32.mrb[0].mxu0
        %388 = vdwg.mxu0
        %v389 = vsub.f32 0.0, %v386
        %v390 = vmul.f32 %v389, 1.442695
        %v391 = vpow.pop %v390
        %v392 = vadd.f32 %v391, 1.0
        %v393 = vrcp.pop %v392
        %v394 = vmax.f32 %v386, 0.0
        %v395 = vand.u32 2147483647, %v386
        %v396 = vsub.f32 0.0, %v395
        %v397 = vmul.f32 %v396, 1.442695
        %v398 = vpow.pop %v397
        %v399 = vadd.f32 %v398, 1.0
        %v400 = vlog2.pop %v399
        %v401 = vmul.f32 %v400, 0.6931472
        %v402 = vadd.f32 %v394, %v401
        %v403 = vadd.f32 %v394, 1.0
        %vm404 = vcmask 296208
        %v405 = vsel %vm404, %v386, -inf
        %406 = vmax.xlane.f32.xlu0 %v405
        %v407 = vpop.xlane.xlu0 %406
        %v408 = vsub.f32 %v386, %v407
        %v409 = vmul.f32 %v408, 1.442695
        %v410 = vpow.pop %v409
        %412 = vrot.lane.b32.xlu0 %v410, 94
        %v413 = vpop.permute.xlu0 %412
        %vm415 = vcmask 17408
        %v416 = vsel %vm415, %v413, 0.0
        %417 = vadd.xlane.f32.xlu0 %v416
        %v418 = vpop.xlane.xlu0 %417
        %v419 = vrcp.pop %v418
        %v420 = vmul.f32 %v410, %v419
        %v423 = vunpack.c.l.s4 1966171168
        %v424 = vunpack.c.0.s8 %v423
        %v425 = vlaneseq
        %v426 = vshrl.u32 %v425, 7
        %v427 = vsub.s32 %v424, %v426
        %v428 = vrot.slane %v386, %v427
        %v429 = vcombine.high %v428, %v428
        %v431 = vunpack.c.l.s4 1966171168
        %v432 = vunpack.c.0.s8 %v431
        %v433 = vlaneseq
        %v434 = vshrl.u32 %v433, 7
        %v435 = vsub.s32 %v432, %v434
        %v436 = vrot.slane %v428, %v435
        %v438 = vunpack.c.l.s4 1966171168
        %v439 = vunpack.c.0.s8 %v438
        %v440 = vlaneseq
        %v441 = vshrl.u32 %v440, 7
        %v442 = vsub.s32 %v439, %v441
        %v443 = vrot.slane %v429, %v442
        %v444 = vlaneseq
        %v445 = vshrl.u32 %v444, 7
        %v446 = vsub.s32 0, %v445
        %v447 = vrot.slane %v436, %v446
        %v448 = vlaneseq
        %v449 = vshrl.u32 %v448, 7
        %v450 = vsub.s32 0, %v449
        %v451 = vrot.slane %v443, %v450
        %v454 = vmul.f32 %v447, %v301
        %v455 = vmul.f32 %v451, %v302
        %vm456 = vcmask 130048
        %v457 = vsel %vm456, %v454, 0.0
        %458 = vadd.xlane.f32.xlu0 %v457
        %v459 = vpop.xlane.xlu0 %458
        %v460 = vsel %vm456, %v455, 0.0
        %461 = vadd.xlane.f32.xlu0 %v460
        %v462 = vpop.xlane.xlu0 %461
        %v463 = vmul.f32 %v386, %v386
        %vm464 = vcmask 123904
        %v465 = vsel %vm464, %v463, 0.0
        %466 = vadd.xlane.f32.xlu0 %v465
        %v467 = vpop.xlane.xlu0 %466
        %v468 = vmul.f32 %v301, %v301
        %v469 = vmul.f32 %v302, %v302
        %v470 = vsel %vm456, %v468, 0.0
        %471 = vadd.xlane.f32.xlu0 %v470
        %v472 = vpop.xlane.xlu0 %471
        %v473 = vsel %vm456, %v469, 0.0
        %474 = vadd.xlane.f32.xlu0 %v473
        %v475 = vpop.xlane.xlu0 %474
        %v478 = vlaneseq
        %v479 = vand.u32 %v478, 127
        %v480 = vlaneseq
        %v481 = vshrl.u32 %v480, 7
        %v482 = vsub.s32 %v479, %v481
        %v483 = vrot.slane %v472, %v482
        %v484 = vlaneseq
        %v485 = vshrl.u32 %v484, 7
        %v486 = vsub.s32 %v479, %v485
        %v487 = vrot.slane %v475, %v486
        %vm488 = vcmask 1041409
        %v489 = vsel %vm488, %v487, %v483
        %v491 = vmul.f32 %v467, %v489
        %v492 = vadd.f32 %v491, 1e-30
        %v493 = vrsqrt.pop %v492
        %v495 = vlaneseq
        %v496 = vshrl.u32 %v495, 7
        %v497 = vsub.s32 0, %v496
        %v498 = vrot.slane %v493, %v497
        %500 = vbcast.lane.b32.xlu0 %v498, 256
        %v501 = vpop.permute.xlu0 %500
        %v502 = vlaneseq
        %v503 = vshrl.u32 %v502, 7
        %v504 = vsub.s32 1, %v503
        %v505 = vrot.slane %v493, %v504
        %507 = vbcast.lane.b32.xlu0 %v505, 256
        %v508 = vpop.permute.xlu0 %507
        %v511 = vmul.f32 %v459, %v501
        %v512 = vmul.f32 %v462, %v508
        %514 = vset.pattern.permute.xlu0 33
        %515 = vperm.xlu0 %514, %v402
        %v516 = vpop.permute.xlu0 %515
        %520 = vset.pattern.permute.xlu0 0
        %521 = vperm.xlu0 %520, %v511
        %v522 = vpop.permute.xlu0 %521
        %523 = vset.pattern.permute.xlu0 0
        %524 = vperm.xlu0 %523, %v512
        %v525 = vpop.permute.xlu0 %524
        %v526 = vlaneseq
        %v527 = vshrl.u32 %v526, 7
        %v528 = vsub.s32 %v479, %v527
        %v529 = vrot.slane %v522, %v528
        %v530 = vlaneseq
        %v531 = vshrl.u32 %v530, 7
        %v532 = vsub.s32 %v479, %v531
        %v533 = vrot.slane %v525, %v532
        %v534 = vsel %vm488, %v533, %v529
        %v536 = vmul.f32 %v516, %v534
        %vm537 = vcmask 58368
        %v538 = vsel %vm537, %v536, -inf
        %539 = vmax.xlane.f32.xlu0 %v538
        %v540 = vpop.xlane.xlu0 %539
        %v541 = vsub.f32 %v536, %v540
        %v542 = vmul.f32 %v541, 1.442695
        %v543 = vpow.pop %v542
        %v544 = vsel %vm537, %v543, 0.0
        %545 = vadd.xlane.f32.xlu0 %v544
        %v546 = vpop.xlane.xlu0 %545
        %v547 = vrcp.pop %v546
        %v548 = vmul.f32 %v543, %v547
        %550 = vset.pattern.permute.xlu0 32
        %551 = vperm.xlu0 %550, %v393
        %v552 = vpop.permute.xlu0 %551
        %v554 = vmul.f32 %v552, %v548
        %v555 = vsub.f32 1.0, %v393
        %557 = vset.pattern.permute.xlu0 32
        %558 = vperm.xlu0 %557, %v555
        %v559 = vpop.permute.xlu0 %558
        %v561 = vmul.f32 %v559, %v303
        %v562 = vadd.f32 %v554, %v561
        %v563 = vld [vmem:[%s3] sm:$0xff]
        %vm564 = vcmask 64512
        %v566 = vsel %vm564, %v562, 0
        %568 = vmatprep.subr.mxu0 0.0
        %569 = vmatpush1.msra.mxu0 %v563
        %570 = vmatprep.subr.mxu0 0.0
        %571 = vmatpush1.msra.mxu0 0.0
        %572 = vmatprep.subr.mxu0 0.0
        %573 = vmatpush1.msra.mxu0 0.0
        %574 = vmatprep.subr.mxu0 0.0
        %575 = vmatpush1.msra.mxu0 0.0
        %576 = vmatprep.subr.mxu0 0.0
        %577 = vmatpush1.msra.mxu0 0.0
        %578 = vmatprep.subr.mxu0 0.0
        %579 = vmatpush1.msra.mxu0 0.0
        %580 = vmatprep.subr.mxu0 0.0
        %581 = vmatpush1.msra.mxu0 0.0
        %582 = vmatprep.subr.mxu0 0.0
        %583 = vmatpush1.msra.mxu0 0.0
        %584 = vmatprep.subr.mxu0 0.0
        %585 = vmatpush1.msra.mxu0 0.0
        %586 = vmatprep.subr.mxu0 0.0
        %587 = vmatpush1.msra.mxu0 0.0
        %588 = vmatprep.subr.mxu0 0.0
        %589 = vmatpush1.msra.mxu0 0.0
        %590 = vmatprep.subr.mxu0 0.0
        %591 = vmatpush1.msra.mxu0 0.0
        %592 = vmatprep.subr.mxu0 0.0
        %593 = vmatpush1.msra.mxu0 0.0
        %594 = vmatprep.subr.mxu0 0.0
        %595 = vmatpush1.msra.mxu0 0.0
        %596 = vmatprep.subr.mxu0 0.0
        %597 = vmatpush1.msra.mxu0 0.0
        %598 = vmatprep.subr.mxu0 0.0
        %599 = vmatpush1.msra.mxu0 0.0
        %600 = vmatprep.subr.mxu0 0.0
        %601 = vmatpush1.msra.mxu0 0.0
        %602 = vmatprep.subr.mxu0 0.0
        %603 = vmatpush1.msra.mxu0 0.0
        %604 = vmatprep.subr.mxu0 0.0
        %605 = vmatpush1.msra.mxu0 0.0
        %606 = vmatprep.subr.mxu0 0.0
        %607 = vmatpush1.msra.mxu0 0.0
        %608 = vmatprep.subr.mxu0 0.0
        %609 = vmatpush1.msra.mxu0 0.0
        %610 = vmatprep.subr.mxu0 0.0
        %611 = vmatpush1.msra.mxu0 0.0
        %612 = vmatprep.subr.mxu0 0.0
        %613 = vmatpush1.msra.mxu0 0.0
        %614 = vmatprep.subr.mxu0 0.0
        %615 = vmatpush1.msra.mxu0 0.0
        %616 = vmatprep.subr.mxu0 0.0
        %617 = vmatpush1.msra.mxu0 0.0
        %618 = vmatprep.subr.mxu0 0.0
        %619 = vmatpush1.msra.mxu0 0.0
        %620 = vmatprep.subr.mxu0 0.0
        %621 = vmatpush1.msra.mxu0 0.0
        %622 = vmatprep.subr.mxu0 0.0
        %623 = vmatpush1.msra.mxu0 0.0
        %624 = vmatprep.subr.mxu0 0.0
        %625 = vmatpush1.msra.mxu0 0.0
        %626 = vmatprep.subr.mxu0 0.0
        %627 = vmatpush1.msra.mxu0 0.0
        %628 = vmatprep.subr.mxu0 0.0
        %629 = vmatpush1.msra.mxu0 0.0
        %630 = vmatprep.subr.mxu0 0.0
        %631 = vmatpush1.msra.mxu0 0.0
        %632 = vmatprep.mubr.f32.mxu0 0.0
        %633 = vmatmul.mubr.f32.gmra.mrb[0].mxu0 %v566
        %v634 = vpop.f32.mrb[0].mxu0
        %v635 = vadd.f32 0.0, %v634
        %v636 = vpop.f32.mrb[0].mxu0
        %637 = vdwg.mxu0
        %639 = vset.pattern.permute.xlu0 34
        %640 = vperm.xlu0 %639, %v420
        %v641 = vpop.permute.xlu0 %640
        %v643 = vmul.f32 %v641, %v635
        %644 = vset.pattern.permute.xlu0 35
        %645 = vperm.xlu0 %644, %v420
        %v646 = vpop.permute.xlu0 %645
        %v648 = vmul.f32 %v646, %v562
        %v649 = vadd.f32 %v643, %v648
        %650 = vset.pattern.permute.xlu0 36
        %651 = vperm.xlu0 %650, %v420
        %v652 = vpop.permute.xlu0 %651
        %v654 = vmul.f32 %v652, %v635
        %656 = vrot.lane.b32.xlu0 %v654, 120
        %v657 = vpop.permute.xlu0 %656
        %v659 = vadd.f32 %v649, %v657
        %v660 = vadd.f32 %v659, 1e-16
        %v661 = vlog2.pop %v660
        %v662 = vmul.f32 %v661, 0.6931472
        %664 = vset.pattern.permute.xlu0 37
        %665 = vperm.xlu0 %664, %v403
        %v666 = vpop.permute.xlu0 %665
        %v668 = vmul.f32 %v666, %v662
        %v669 = vmul.f32 %v668, 1.442695
        %v670 = vpow.pop %v669
        %v671 = vsel %vm537, %v670, 0.0
        %672 = vadd.xlane.f32.xlu0 %v671
        %v673 = vpop.xlane.xlu0 %672
        %v674 = vrcp.pop %v673
        %v675 = vmul.f32 %v670, %v674
        %v676 = vlaneseq
        %v677 = vshrl.u32 %v676, 7
        %v678 = vsub.s32 0, %v677
        %v679 = vrot.slane %v675, %v678
        %681 = vbcast.lane.b32.xlu0 %v679, 256
        %v682 = vpop.permute.xlu0 %681
        %v683 = vlaneseq
        %v684 = vshrl.u32 %v683, 7
        %v685 = vsub.s32 1, %v684
        %v686 = vrot.slane %v675, %v685
        %688 = vbcast.lane.b32.xlu0 %v686, 256
        %v689 = vpop.permute.xlu0 %688
        %v691 = vunpack.c.l.s4 1966171168
        %v692 = vunpack.c.0.s8 %v691
        %v693 = vlaneseq
        %v694 = vshrl.u32 %v693, 7
        %v695 = vsub.s32 %v692, %v694
        %v696 = vrot.slane %v393, %v695
        %v697 = vcombine.high %v696, %v696
        %v699 = vunpack.c.l.s4 1966171168
        %v700 = vunpack.c.0.s8 %v699
        %v701 = vlaneseq
        %v702 = vshrl.u32 %v701, 7
        %v703 = vsub.s32 %v700, %v702
        %v704 = vrot.slane %v696, %v703
        %v706 = vunpack.c.l.s4 1966171168
        %v707 = vunpack.c.0.s8 %v706
        %v708 = vlaneseq
        %v709 = vshrl.u32 %v708, 7
        %v710 = vsub.s32 %v707, %v709
        %v711 = vrot.slane %v697, %v710
        %v712 = vlaneseq
        %v713 = vshrl.u32 %v712, 7
        %v714 = vsub.s32 0, %v713
        %v715 = vrot.slane %v704, %v714
        %v716 = vlaneseq
        %v717 = vshrl.u32 %v716, 7
        %v718 = vsub.s32 0, %v717
        %v719 = vrot.slane %v711, %v718
        %v722 = vmul.f32 %v682, %v715
        %v723 = vmul.f32 %v689, %v719
        %v724 = vmul.f32 %v682, %v447
        %v725 = vmul.f32 %v689, %v451
        %v726 = vsub.f32 1.0, %v722
        %v727 = vsub.f32 1.0, %v723
        %730 = vrot.lane.b32.xlu0 %v726, 112
        %v731 = vpop.permute.xlu0 %730
        %732 = vrot.lane.b32.xlu0 %v727, 112
        %v733 = vpop.permute.xlu0 %732
        %v736 = vmul.f32 %v301, %v731
        %v737 = vmul.f32 %v302, %v733
        %740 = vrot.lane.b32.xlu0 %v724, 88
        %v741 = vpop.permute.xlu0 %740
        %742 = vrot.lane.b32.xlu0 %v725, 88
        %v743 = vpop.permute.xlu0 %742
        %v746 = vadd.f32 %v736, %v741
        %v747 = vadd.f32 %v737, %v743
        %748 = vst.msk [vmem:[#allocation7] sm:$0xff] %vm456, %v746
        %749 = vst.msk [vmem:[#allocation7 + $0x8] sm:$0xff] %vm456, %v747
        %750 = vst.msk [vmem:[#allocation2] sm:$0x3] %vm537, %v675
        %751 = vst.msk [vmem:[%s281] sm:$0x3] %vm537, %v675
        %s752 = sand.u32 %s163, 1
        %s753 = scalar_lea.sflag [#allocation5], %s752
        %s754 = sand.u32 %s163, 1
        %s755 = smul.addr %s754, 2
        %s756 = scalar_lea.vmem [#allocation6], %s755
        // Predicated region
        $region53: #{writer_forward.1} parent=43 // pred_check
          %p757 = pneg %p173
        $region54: #{writer_forward.1} parent=43 // pred_check_branch
          %759 = sbr.rel (%p757) target = $region56
        $region55: #{writer_forward.1} parent=43 // pred_region
          %s761 = ssub.s32 32, 32
          %762 = vsyncadd %s753, %s761
          %s763 = smul.addr %s24, 32
          %s764 = scalar_lea.hbm %s6, %s763
          %s766 = sshll.u32 %s756, 4
          %s767 = int_to_ptr.vmem [resolvable:$true] %s766
          %769 = dma.vmem_to_hbm [thread:$0]  %s767, 32, %s764, %s753
        $region56: #{writer_forward.1} parent=43 // pred_fallthru
          _
        // Predicated region
        $region57: #{writer_forward.1} parent=43 // pred_check
          %p770 = pneg %p194
        $region58: #{writer_forward.1} parent=43 // pred_check_branch
          %772 = sbr.rel (%p770) target = $region60
        $region59: #{writer_forward.1} parent=43 // pred_region
          %s774 = ssub.s32 256, 256
          %775 = vsyncadd [#allocation8], %s774
          %s776 = sshll.u32 [#allocation7], 4
          %s777 = int_to_ptr.vmem [resolvable:$true] %s776
          %782 = dma.vmem_to_hbm [thread:$0]  %s777, 256, %s7, [#allocation8], 128, 128, 8
        $region60: #{writer_forward.1} parent=43 // pred_fallthru
          _
        // Predicated region
        $region61: #{writer_forward.1} parent=43 // pred_check
          %p783 = pneg %p194
        $region62: #{writer_forward.1} parent=43 // pred_check_branch
          %785 = sbr.rel (%p783) target = $region64
        $region63: #{writer_forward.1} parent=43 // pred_region
          %786 = dma.done [#allocation8], 256
        $region64: #{writer_forward.1} parent=43 // pred_fallthru
          _
      $region44: #{writer_forward.1} parent=5 // pred_fallthru
        _
      %p787 = scmp.le.s32.totalorder 2, %s19
      // Predicated region
      $region65: #{writer_forward.1} parent=5 // pred_check
        %p788 = pneg %p787
      $region66: #{writer_forward.1} parent=5 // pred_check_branch
        %790 = sbr.rel (%p788) target = $region68
      $region67: #{writer_forward.1} parent=5 // pred_region
        %s791 = ssub.s32 %s19, 2
        // Predicated region
        $region69: #{writer_forward.1} parent=67 // pred_check
          %p792 = pneg %p179
        $region70: #{writer_forward.1} parent=67 // pred_check_branch
          %794 = sbr.rel (%p792) target = $region72
        $region71: #{writer_forward.1} parent=67 // pred_region
          %s795 = sand.u32 %s164, 1
          %s796 = scalar_lea.sflag [#allocation5], %s795
          %s797 = sand.u32 %s164, 1
          %s798 = smul.addr %s797, 2
          %s799 = scalar_lea.vmem [#allocation6], %s798
          %800 = dma.done %s796, 32
        $region72: #{writer_forward.1} parent=67 // pred_fallthru
          _
      $region68: #{writer_forward.1} parent=5 // pred_fallthru
        _
    $region6: #{writer_forward.1} parent=1 // loop_footer
      %s23 = sadd.s32 1, %s19
    $region7: #{writer_forward.1} parent=1 // loop_footer_branch
      %18 = sbr.rel target = $region3
    $region8: #{writer_forward.1} parent=1 // loop_exit
      _
    %801 = vsyncpa [#allocation4], 1
    %s802 = scalar_lea.sflag [#allocation4], 1
    %803 = vsyncpa %s802, 1
    %804 = vsyncpa [#allocation5], 1
    %s805 = scalar_lea.sflag [#allocation5], 1
    %806 = vsyncpa %s805, 1
    %807 = vsyncpa [#allocation8], 1

</llo_original>
